<compile_context>
chip_gen: v6e
topology: v6e:2x2x1
jax: 0.10.0
libtpu: 0.0.40
codegen_flags: <defaults>
</compile_context>

<pallas_src>
import math
from functools import partial

import numpy as np
import jax
import jax.numpy as jnp
from jax.experimental import pallas as pl
from jax.experimental.pallas import tpu as pltpu

DATA_DIM = 3          # pauli_s_const() -> su(2) structure constants => data_dim = 3
DT = 0.1

# Below this batch size the whole runtime is pallas_call launch + grid overhead
# and fused XLA wins.
# TODO(synk): measure the true crossover with xprof (min of N runs); expected in
# the tens of thousands of rows.
_PALLAS_MIN_BATCH = 32768

# Rows of 128 batch elements per grid step (per 3-slab block).  2048 rows ->
# 3*2048*128*4 B = 3 MiB useful per input block (same for output), i.e. ~6 MiB
# of HBM traffic per step against ~0.35 us/step overhead, while the
# double-buffered in+out VMEM footprint stays ~12 MiB.
_TILE_ROWS_CAP = 2048
# In-kernel row chunk: 64 rows x 128 lanes = 8 vregs per slab; 3 input slabs +
# 1 output slab live ~= 32 vregs < 64 physical -> no spills.
_CHUNK_ROWS = 64
_VMEM_LIMIT_BYTES = 32 * 1024 * 1024


# ---------------------------------------------------------------------------
# Parameter / constant setup (deterministic, in-script)
# ---------------------------------------------------------------------------
def pauli_s_const():
    """Antisymmetric f_ijk and symmetric d_ijk structure constants of su(2)."""
    sx = np.array([[0.0, 1.0], [1.0, 0.0]], dtype=np.complex64)
    sy = np.array([[0.0, -1.0j], [1.0j, 0.0]], dtype=np.complex64)
    sz = np.array([[1.0, 0.0], [0.0, -1.0]], dtype=np.complex64)
    s = [sx, sy, sz]
    n = 3
    f = np.zeros((n, n, n), dtype=np.float32)
    d = np.zeros((n, n, n), dtype=np.float32)
    for i in range(n):
        for j in range(n):
            for k in range(n):
                comm = s[i] @ s[j] - s[j] @ s[i]
                anti = s[i] @ s[j] + s[j] @ s[i]
                f[i, j, k] = float(np.real(-0.25j * np.trace(comm @ s[k])))
                d[i, j, k] = float(np.real(0.25 * np.trace(anti @ s[k])))
    return jnp.asarray(f), jnp.asarray(d)


def init_params(key, data_dim=DATA_DIM):
    """Mimic nn.init.kaiming_uniform_(a=10) for v_x, v_y and uniform for omega."""
    k1, k2, k3 = jax.random.split(key, 3)
    fan_in = data_dim
    bound_v = math.sqrt(6.0 / ((1.0 + 10.0 ** 2) * fan_in))   # kaiming_uniform_, a=10
    v_x = jax.random.uniform(k1, (data_dim, data_dim), jnp.float32, -bound_v, bound_v)
    v_y = jax.random.uniform(k2, (data_dim, data_dim), jnp.float32, -bound_v, bound_v)
    bound_o = 1.0 / math.sqrt(fan_in)
    omega = jax.random.uniform(k3, (data_dim,), jnp.float32, -bound_o, bound_o)
    return v_x, v_y, omega


def get_L(v_x, v_y, omega, f, d):
    """Exact JAX transcription of exp_LL.get_L (tiny parameter-only contractions)."""
    c_re = jnp.einsum('ki,kj->ij', v_x, v_x) + jnp.einsum('ki,kj->ij', v_y, v_y)
    c_im = jnp.einsum('ki,kj->ij', v_x, v_y) - jnp.einsum('ki,kj->ij', v_y, v_x)
    re_1 = -4.0 * jnp.einsum('mjk,nik,ij->mn', f, f, c_re)
    re_2 = -4.0 * jnp.einsum('mik,njk,ij->mn', f, f, c_re)
    im_1 = 4.0 * jnp.einsum('mjk,nik,ij->mn', f, d, c_im)
    im_2 = -4.0 * jnp.einsum('mik,njk,ij->mn', f, d, c_im)
    d_super_x = (re_1 + re_2) + (im_1 + im_2)
    tr_id = 4.0 * jnp.einsum('imj,ij->m', f, c_im)
    h_commutator_x = -4.0 * jnp.einsum('ijk,k->ij', f, omega)
    dd = v_x.shape[0]
    L = jnp.zeros((dd + 1, dd + 1), jnp.float32)
    L = L.at[1:, 1:].set(h_commutator_x + d_super_x)
    L = L.at[1:, 0].set(tr_id)
    return L


# ---------------------------------------------------------------------------
# Pallas kernel: lane-dense batched affine map  y_t[j] = b[j] + sum_k W[j,k]*x_t[k]
# ---------------------------------------------------------------------------
def _affine_kernel(wb_ref, x_ref, o_ref):
    """wb_ref: SMEM (12,) f32 = [W[0,0..2], W[1,0..2], W[2,0..2], b[0..2]]
    x_ref / o_ref: VMEM (3, TR, 128) f32 -- feature-major, batch on sublanes+lanes.
    """
    tr = x_ref.shape[1]
    chunk = min(_CHUNK_ROWS, tr)
    n_chunks = tr // chunk          # tile_rows is chosen so this divides evenly

    def do_chunk(r0):
        x0 = x_ref[0, pl.ds(r0, chunk), :]
        x1 = x_ref[1, pl.ds(r0, chunk), :]
        x2 = x_ref[2, pl.ds(r0, chunk), :]
        # 9 scalar*vector FMAs + 3 scalar bias adds per chunk; scalars from SMEM
        # broadcast for free on the VPU (no sublane/lane broadcasts, no MXU).
        for j in range(3):
            o_ref[j, pl.ds(r0, chunk), :] = (
                wb_ref[9 + j]
                + wb_ref[3 * j + 0] * x0
                + wb_ref[3 * j + 1] * x1
                + wb_ref[3 * j + 2] * x2)

    if n_chunks == 1:
        do_chunk(0)
    else:
        @pl.loop(0, n_chunks)
        def _(c):
            do_chunk(pl.multiple_of(c * chunk, chunk))


def pallas_affine(x, w_mat, bias, *, tile_rows=None):
    """Compute bias + x @ w_mat.T with a lane-dense Pallas kernel.

    x: (B, 3) f32, w_mat: (3, 3) f32, bias: (3,) f32
    y[i, j] = bias[j] + sum_k w_mat[j, k] * x[i, k]
    """
    x = x.astype(jnp.float32)
    B, D = x.shape
    R = pl.cdiv(B, 128)             # batch rows of 128 lanes
    Bp = R * 128

    # Layout plumbing: batch axis -> lane axis.  The transpose (and the <=127
    # column pad that legalizes the (D, R, 128) reshape) is one XLA copy fusion;
    # the reshape itself is free (contiguous).
    xt = jnp.transpose(x)                                   # (D, B)
    if Bp != B:
        xt = jnp.pad(xt, ((0, 0), (0, Bp - B)))             # fuses with the transpose
    xt = xt.reshape(D, R, 128)

    if tile_rows is None:
        # Big tiles to amortize per-step overhead, but >= 2 grid steps when the
        # batch allows it (both v7x TensorCores get work).  Keep tile_rows a
        # multiple of the in-kernel chunk (and of 8 for sublane alignment).
        half = pl.cdiv(R, 2)
        if half <= _CHUNK_ROWS:
            tile_rows = max(8, pl.cdiv(half, 8) * 8)
        else:
            tile_rows = min(_TILE_ROWS_CAP,
                            pl.cdiv(half, _CHUNK_ROWS) * _CHUNK_ROWS)
    grid = (pl.cdiv(R, tile_rows),)   # ragged last block is masked by Pallas

    # W (9 scalars) + bias (3 scalars) through SMEM: no VMEM pipelines / DMAs
    # for them and no broadcast shuffles in the inner loop.
    wb = jnp.concatenate([w_mat.reshape(-1), bias.reshape(-1)]).astype(jnp.float32)

    cost = pl.CostEstimate(
        flops=2 * Bp * D * D + Bp * D,
        transcendentals=0,
        bytes_accessed=2 * D * Bp * 4 + wb.size * 4,
    )

    yt = pl.pallas_call(
        _affine_kernel,
        out_shape=jax.ShapeDtypeStruct((D, R, 128), jnp.float32),
        grid=grid,
        in_specs=[
            pl.BlockSpec(memory_space=pltpu.MemorySpace.SMEM),       # wb (12,)
            pl.BlockSpec((D, tile_rows, 128), lambda i: (0, i, 0)),  # x^T slab
        ],
        out_specs=pl.BlockSpec((D, tile_rows, 128), lambda i: (0, i, 0)),
        compiler_params=pltpu.CompilerParams(
            dimension_semantics=("parallel",),
            vmem_limit_bytes=_VMEM_LIMIT_BYTES,
        ),
        cost_estimate=cost,
    )(wb, xt)

    # Layout plumbing back: (D, R, 128) -> (D, Bp) -> drop pad -> (B, D).
    return jnp.transpose(yt.reshape(D, Bp)[:, :B])


# ---------------------------------------------------------------------------
# exp_LL.forward
# ---------------------------------------------------------------------------
@partial(jax.jit, static_argnames=("dt", "force_pallas"))
def exp_ll_forward(t, x, v_x, v_y, omega, f, d, dt=DT, force_pallas=False):
    del t  # time unused (kept for API compatibility, as in the PyTorch module)
    L = get_L(v_x, v_y, omega, f, d)
    # TODO(synk): torch.matrix_exp (Pade scaling-and-squaring on the tiny
    # (data_dim+1)x(data_dim+1) matrix) has no clean Pallas equivalent; computed
    # with jax.scipy.linalg.expm in jitted XLA glue.
    exp_dt_L = jax.scipy.linalg.expm(dt * L)
    w_mat = exp_dt_L[1:, 1:]        # y = b + x @ w_mat.T
    bias = exp_dt_L[1:, 0]
    if force_pallas or x.shape[0] >= _PALLAS_MIN_BATCH:
        return pallas_affine(x, w_mat, bias)
    # Small/medium batches: a custom kernel is pure launch overhead; let XLA fuse.
    return bias + x @ w_mat.T


if __name__ == "__main__":
    key = jax.random.PRNGKey(0)
    kp, kx1, kx2 = jax.random.split(key, 3)

    f, d = pauli_s_const()
    v_x, v_y, omega = init_params(kp, DATA_DIM)
    t = jnp.zeros(())  # unused

    # Plain-JAX reference pieces for checking both dispatch paths.
    L = get_L(v_x, v_y, omega, f, d)
    exp_dt_L = jax.scipy.linalg.expm(DT * L)

    # 1) Pallas path (forced, so the kernel runs at a small test shape).
    #    batch=2000 -> R=16 lane-rows, tile_rows=8, 2-step grid, and the
    #    2000->2048 transpose-fused pad/slice plumbing is exercised.
    batch = 2000
    x = jax.random.normal(kx1, (batch, DATA_DIM), dtype=jnp.float32)
    y = exp_ll_forward(t, x, v_x, v_y, omega, f, d, dt=DT, force_pallas=True)
    y = jax.block_until_ready(y)
    assert y.shape == (batch, DATA_DIM)
    y_ref = exp_dt_L[1:, 0] + x @ exp_dt_L[1:, 1:].T
    np.testing.assert_allclose(np.asarray(y), np.asarray(y_ref),
                               rtol=1e-5, atol=1e-5)

    # 2) Default dispatch at a tiny batch -> fused XLA fallback path.
    x_small = jax.random.normal(kx2, (17, DATA_DIM), dtype=jnp.float32)
    y_small = jax.block_until_ready(
        exp_ll_forward(t, x_small, v_x, v_y, omega, f, d, dt=DT))
    y_small_ref = exp_dt_L[1:, 0] + x_small @ exp_dt_L[1:, 1:].T
    np.testing.assert_allclose(np.asarray(y_small), np.asarray(y_small_ref),
                               rtol=1e-5, atol=1e-5)

    print("KERNEL_OK")
</pallas_src>

<mosaic_0001>
module attributes {stable_mosaic.version = 11 : i64} {
  func.func @_affine_kernel(%arg0: i32, %arg1: memref<12xf32, #tpu.memory_space<smem>>, %arg2: memref<3x8x128xf32, #tpu.memory_space<vmem>>, %arg3: memref<3x8x128xf32, #tpu.memory_space<vmem>>) attributes {dimension_semantics = [#tpu.dimension_semantics<parallel>], iteration_bounds = array<i64: 2>, scalar_prefetch = 0 : i64, scratch_operands = 0 : i64, tpu.core_type = #tpu.core_type<tc>, window_params = [{transform_indices = @transform_0, window_bounds = array<i64: 12>}, {transform_indices = @transform_1, window_bounds = array<i64: 3, 8, 128>}, {transform_indices = @transform_2, window_bounds = array<i64: 3, 8, 128>}]} {
    %c0 = arith.constant 0 : index
    %c0_0 = arith.constant 0 : index
    %c0_1 = arith.constant 0 : index
    %0 = vector.load %arg2[%c0, %c0_0, %c0_1] : memref<3x8x128xf32, #tpu.memory_space<vmem>>, vector<1x8x128xf32>
    %1 = vector.shape_cast %0 : vector<1x8x128xf32> to vector<8x128xf32>
    %c1 = arith.constant 1 : index
    %c0_2 = arith.constant 0 : index
    %c0_3 = arith.constant 0 : index
    %2 = vector.load %arg2[%c1, %c0_2, %c0_3] : memref<3x8x128xf32, #tpu.memory_space<vmem>>, vector<1x8x128xf32>
    %3 = vector.shape_cast %2 : vector<1x8x128xf32> to vector<8x128xf32>
    %c2 = arith.constant 2 : index
    %c0_4 = arith.constant 0 : index
    %c0_5 = arith.constant 0 : index
    %4 = vector.load %arg2[%c2, %c0_4, %c0_5] : memref<3x8x128xf32, #tpu.memory_space<vmem>>, vector<1x8x128xf32>
    %5 = vector.shape_cast %4 : vector<1x8x128xf32> to vector<8x128xf32>
    %c9 = arith.constant 9 : index
    %6 = memref.load %arg1[%c9] : memref<12xf32, #tpu.memory_space<smem>>
    %c0_6 = arith.constant 0 : index
    %7 = memref.load %arg1[%c0_6] : memref<12xf32, #tpu.memory_space<smem>>
    %8 = vector.broadcast %7 : f32 to vector<8x128xf32>
    %9 = arith.mulf %8, %1 : vector<8x128xf32>
    %10 = vector.broadcast %6 : f32 to vector<8x128xf32>
    %11 = arith.addf %10, %9 : vector<8x128xf32>
    %c1_7 = arith.constant 1 : index
    %12 = memref.load %arg1[%c1_7] : memref<12xf32, #tpu.memory_space<smem>>
    %13 = vector.broadcast %12 : f32 to vector<8x128xf32>
    %14 = arith.mulf %13, %3 : vector<8x128xf32>
    %15 = arith.addf %11, %14 : vector<8x128xf32>
    %c2_8 = arith.constant 2 : index
    %16 = memref.load %arg1[%c2_8] : memref<12xf32, #tpu.memory_space<smem>>
    %17 = vector.broadcast %16 : f32 to vector<8x128xf32>
    %18 = arith.mulf %17, %5 : vector<8x128xf32>
    %19 = arith.addf %15, %18 : vector<8x128xf32>
    %c0_9 = arith.constant 0 : index
    %c0_10 = arith.constant 0 : index
    %c0_11 = arith.constant 0 : index
    %20 = vector.load %arg3[%c0_9, %c0_10, %c0_11] : memref<3x8x128xf32, #tpu.memory_space<vmem>>, vector<1x8x128xf32>
    %21 = vector.shape_cast %20 : vector<1x8x128xf32> to vector<8x128xf32>
    %22 = vector.shape_cast %19 : vector<8x128xf32> to vector<1x8x128xf32>
    tpu.vector_store %arg3[%c0_9, %c0_10, %c0_11], %22 {strides = array<i32>} : memref<3x8x128xf32, #tpu.memory_space<vmem>>, vector<1x8x128xf32>,
    %c10 = arith.constant 10 : index
    %23 = memref.load %arg1[%c10] : memref<12xf32, #tpu.memory_space<smem>>
    %c3 = arith.constant 3 : index
    %24 = memref.load %arg1[%c3] : memref<12xf32, #tpu.memory_space<smem>>
    %25 = vector.broadcast %24 : f32 to vector<8x128xf32>
    %26 = arith.mulf %25, %1 : vector<8x128xf32>
    %27 = vector.broadcast %23 : f32 to vector<8x128xf32>
    %28 = arith.addf %27, %26 : vector<8x128xf32>
    %c4 = arith.constant 4 : index
    %29 = memref.load %arg1[%c4] : memref<12xf32, #tpu.memory_space<smem>>
    %30 = vector.broadcast %29 : f32 to vector<8x128xf32>
    %31 = arith.mulf %30, %3 : vector<8x128xf32>
    %32 = arith.addf %28, %31 : vector<8x128xf32>
    %c5 = arith.constant 5 : index
    %33 = memref.load %arg1[%c5] : memref<12xf32, #tpu.memory_space<smem>>
    %34 = vector.broadcast %33 : f32 to vector<8x128xf32>
    %35 = arith.mulf %34, %5 : vector<8x128xf32>
    %36 = arith.addf %32, %35 : vector<8x128xf32>
    %c1_12 = arith.constant 1 : index
    %c0_13 = arith.constant 0 : index
    %c0_14 = arith.constant 0 : index
    %37 = vector.load %arg3[%c1_12, %c0_13, %c0_14] : memref<3x8x128xf32, #tpu.memory_space<vmem>>, vector<1x8x128xf32>
    %38 = vector.shape_cast %37 : vector<1x8x128xf32> to vector<8x128xf32>
    %39 = vector.shape_cast %36 : vector<8x128xf32> to vector<1x8x128xf32>
    tpu.vector_store %arg3[%c1_12, %c0_13, %c0_14], %39 {strides = array<i32>} : memref<3x8x128xf32, #tpu.memory_space<vmem>>, vector<1x8x128xf32>,
    %c11 = arith.constant 11 : index
    %40 = memref.load %arg1[%c11] : memref<12xf32, #tpu.memory_space<smem>>
    %c6 = arith.constant 6 : index
    %41 = memref.load %arg1[%c6] : memref<12xf32, #tpu.memory_space<smem>>
    %42 = vector.broadcast %41 : f32 to vector<8x128xf32>
    %43 = arith.mulf %42, %1 : vector<8x128xf32>
    %44 = vector.broadcast %40 : f32 to vector<8x128xf32>
    %45 = arith.addf %44, %43 : vector<8x128xf32>
    %c7 = arith.constant 7 : index
    %46 = memref.load %arg1[%c7] : memref<12xf32, #tpu.memory_space<smem>>
    %47 = vector.broadcast %46 : f32 to vector<8x128xf32>
    %48 = arith.mulf %47, %3 : vector<8x128xf32>
    %49 = arith.addf %45, %48 : vector<8x128xf32>
    %c8 = arith.constant 8 : index
    %50 = memref.load %arg1[%c8] : memref<12xf32, #tpu.memory_space<smem>>
    %51 = vector.broadcast %50 : f32 to vector<8x128xf32>
    %52 = arith.mulf %51, %5 : vector<8x128xf32>
    %53 = arith.addf %49, %52 : vector<8x128xf32>
    %c2_15 = arith.constant 2 : index
    %c0_16 = arith.constant 0 : index
    %c0_17 = arith.constant 0 : index
    %54 = vector.load %arg3[%c2_15, %c0_16, %c0_17] : memref<3x8x128xf32, #tpu.memory_space<vmem>>, vector<1x8x128xf32>
    %55 = vector.shape_cast %54 : vector<1x8x128xf32> to vector<8x128xf32>
    %56 = vector.shape_cast %53 : vector<8x128xf32> to vector<1x8x128xf32>
    tpu.vector_store %arg3[%c2_15, %c0_16, %c0_17], %56 {strides = array<i32>} : memref<3x8x128xf32, #tpu.memory_space<vmem>>, vector<1x8x128xf32>,
    return
  }
  func.func @transform_0(%arg0: i32) -> i32 {
    %c0_i32 = arith.constant 0 : i32
    %c0_i32_0 = arith.constant 0 : i32
    return %c0_i32 : i32
  }
  func.func @transform_1(%arg0: i32) -> (i32, i32, i32) {
    %c0_i32 = arith.constant 0 : i32
    %c0_i32_0 = arith.constant 0 : i32
    %c0_i32_1 = arith.constant 0 : i32
    return %c0_i32, %arg0, %c0_i32_0 : i32, i32, i32
  }
  func.func @transform_2(%arg0: i32) -> (i32, i32, i32) {
    %c0_i32 = arith.constant 0 : i32
    %c0_i32_0 = arith.constant 0 : i32
    %c0_i32_1 = arith.constant 0 : i32
    return %c0_i32, %arg0, %c0_i32_0 : i32, i32, i32
  }
}

</mosaic_0001>

<llo_original>
// kernel: custom-call.11
$region0: #{custom-call.11}
  %s0 = inlined_call_operand.vmem [shape: f32[4,4], index: 0, kind: input, shape index: {}]
  %s1 = inlined_call_operand.vmem [shape: f32[4,4], index: 1, kind: output, shape index: {0}]
  %s2 = inlined_call_operand.hbm [shape: s32[4], index: 2, kind: output, shape index: {1}]
  %s3 = inlined_call_operand.vmem [shape: s32[4], index: 3, kind: output, shape index: {2}]
  %4 = xla_tuple %s1, %s2, %s3
  $region1: #{custom-call.11} parent=0
    #allocation0 [shape = 'u8[4096]{0}', space=vmem, size = 0x1000, scoped, tag = 'operand span for operand 0']
    #allocation1 [shape = 'u8[2048]{0}', space=vmem, size = 0x800, scoped, tag = 'packed  for operand 0']
    #allocation2 [shape = 'u8[4096]{0}', space=vmem, size = 0x1000, scoped, tag = 'operand span for operand 1']
    #allocation3 [shape = 'u8[2048]{0}', space=vmem, size = 0x800, scoped, tag = 'packed  for operand 1']
    #allocation4 [shape = 'u8[4096]{0}', space=vmem, size = 0x1000, scoped, tag = 'operand span for operand 2']
    #allocation5 [shape = 'u8[512]{0}', space=vmem, size = 0x400, scoped, tag = 'packed  for operand 2']
    #allocation6 [shape = 's32[1]{0}', space=sflag, size = 0x4, scoped, tag = 'scoped memory for custom-call.11']
    #allocation7 [shape = 'u8[4096]{0}', space=vmem, size = 0x1000, scoped, tag = 'operand span for operand 3']
    #allocation8 [shape = 'u8[512]{0}', space=vmem, size = 0x400, scoped, tag = 'packed  for operand 3']
    #allocation9 [shape = 's32[4,128]{1,0}', space=vmem, size = 0x1000, scoped, tag = 'scratch for permutations']
    %5 = vsyncpa [#allocation6], 0
    %p7 = scmp.gt.s32.totalorder 4, 0
    // Predicated region
    $region2: #{custom-call.11} parent=1 // pred_check
      %p8 = pneg %p7
    $region3: #{custom-call.11} parent=1 // pred_check_branch
      %10 = sbr.rel (%p8) target = $region5
    $region4: #{custom-call.11} parent=1 // pred_region
      %s11 = sshra.s32 4, 3
      %p12 = scmp.gt.s32.totalorder %s11, 0
      // Predicated region
      $region6: #{custom-call.11} parent=4 // pred_check
        %p13 = pneg %p12
      $region7: #{custom-call.11} parent=4 // pred_check_branch
        %15 = sbr.rel (%p13) target = $region9
      $region8: #{custom-call.11} parent=4 // pred_region
        %s16 = ssub.s32 %s11, 1
        %s17 = smul.u32 %s16, 128
        %s18 = sshra.s32 %s17, 4
        %s19 = scalar_lea.vmem %s0, %s18
        %v20 = vld [vmem:[%s0] sm:$0xff]
        // While loop
        $region10: #{custom-call.11} parent=8 // loop_pre_header
          _
        $region11: #{custom-call.11} parent=8 // loop_header
          %s21 = sphi %s0, %s43
          %s22 = sphi [#allocation1], %s44
          %v23 = vphi %v20, %v45
          %s24 = ssub.s32 %s19, 64
          %p25 = scmp.gt.s32.totalorder %s21, %s24
        $region12: #{custom-call.11} parent=8 // loop_header_branch
          %27 = sbr.rel (%p25) target = $region16
        $region13: #{custom-call.11} parent=8 // loop_body
          %28 = vst [vmem:[%s22] sm:$0xff] %v23
          %v29 = vld [vmem:[%s21 + $0x8] sm:$0xff]
          %30 = vst [vmem:[%s22 + $0x8] sm:$0xff] %v29
          %v31 = vld [vmem:[%s21 + $0x10] sm:$0xff]
          %32 = vst [vmem:[%s22 + $0x10] sm:$0xff] %v31
          %v33 = vld [vmem:[%s21 + $0x18] sm:$0xff]
          %34 = vst [vmem:[%s22 + $0x18] sm:$0xff] %v33
          %v35 = vld [vmem:[%s21 + $0x20] sm:$0xff]
          %36 = vst [vmem:[%s22 + $0x20] sm:$0xff] %v35
          %v37 = vld [vmem:[%s21 + $0x28] sm:$0xff]
          %38 = vst [vmem:[%s22 + $0x28] sm:$0xff] %v37
          %v39 = vld [vmem:[%s21 + $0x30] sm:$0xff]
          %40 = vst [vmem:[%s22 + $0x30] sm:$0xff] %v39
          %v41 = vld [vmem:[%s21 + $0x38] sm:$0xff]
          %42 = vst [vmem:[%s22 + $0x38] sm:$0xff] %v41
        $region14: #{custom-call.11} parent=8 // loop_footer
          %s43 = scalar_lea.vmem %s21, 64
          %s44 = scalar_lea.vmem %s22, 64
          %v45 = vld [vmem:[%s21 + $0x40] sm:$0xff]
        $region15: #{custom-call.11} parent=8 // loop_footer_branch
          %46 = sbr.rel target = $region11
        $region16: #{custom-call.11} parent=8 // loop_exit
          _
        // While loop
        $region17: #{custom-call.11} parent=8 // loop_pre_header
          _
        $region18: #{custom-call.11} parent=8 // loop_header
          %s47 = sphi %s21, %s55
          %s48 = sphi %s22, %s56
          %v49 = vphi %v23, %v49
          %p50 = scmp.gt.s32.totalorder %s47, %s19
        $region19: #{custom-call.11} parent=8 // loop_header_branch
          %52 = sbr.rel (%p50) target = $region23
        $region20: #{custom-call.11} parent=8 // loop_body
          %v53 = vld [vmem:[%s47] sm:$0xff]
          %54 = vst [vmem:[%s48] sm:$0xff] %v53
        $region21: #{custom-call.11} parent=8 // loop_footer
          %s55 = scalar_lea.vmem %s47, 8
          %s56 = scalar_lea.vmem %s48, 8
        $region22: #{custom-call.11} parent=8 // loop_footer_branch
          %57 = sbr.rel target = $region18
        $region23: #{custom-call.11} parent=8 // loop_exit
          _
      $region9: #{custom-call.11} parent=4 // pred_fallthru
        _
      %s58 = sand.u32 4, 7
      %s59 = sshll.u32 1, %s58
      %s60 = ssub.s32 %s59, 1
      %s61 = smul.u32 %s11, 128
      %s62 = sshra.s32 %s61, 4
      %s63 = scalar_lea.vmem [#allocation1], %s62
      %s64 = smul.u32 %s11, 128
      %s65 = sshra.s32 %s64, 4
      %s66 = scalar_lea.vmem %s0, %s65
      %v67 = vld [vmem:[%s66] sm:%s60]
      %68 = vst [vmem:[%s63] sm:%s60] %v67
    $region5: #{custom-call.11} parent=1 // pred_fallthru
      _
    %s70 = sshll.u32 1, 4
    %s71 = ssub.s32 %s70, 1
    %v72 = vld [vmem:[#allocation1] sm:%s71]
    %73 = vst [vmem:[#allocation0] sm:%s71] %v72
    %v74 = vld [vmem:[#allocation0] sm:$0xff]
    %75 = vst [vmem:[#allocation2] sm:$0xff] %v74
    %76 = vst [vmem:[#allocation4] sm:$0x1] 0
    %v77 = vlaneseq
    %v78 = vshrl.u32 %v77, 7
    %v79 = vmov %v78
    %81 = vst [vmem:[#allocation9] sm:$0xff] %v79
    loop: start=0, step=1, limit=4
    $region25: #{custom-call.11} parent=1 // loop_pre_header
      _
    $region26: #{custom-call.11} parent=1 // loop_header
      %s83 = sphi 0, %s87
      %p84 = scmp.ge.s32.totalorder %s83, 4
    $region27: #{custom-call.11} parent=1 // loop_header_branch
      %86 = sbr.rel (%p84) target = $region31
    $region28: #{custom-call.11} parent=1 // loop_body
      %v88 = vstv %s83
      %v89 = vlaneseq
      %v90 = vshrl.u32 %v89, 7
      %v91 = vmov %v90
      %v92 = vld [vmem:[#allocation2] sm:$0xff]
      %v93 = vand.u32 2147483647, %v92
      %v95 = vstv %s83
      %vm96 = vcmp.ge.s32.totalorder %v91, %v95
      %vm97 = vcmp.lt.s32.totalorder %v91, 4
      %vm98 = vmand %vm96, %vm97
      %vm99 = vcmp.lt.f32.partialorder -inf, %v93
      %vm100 = vmand %vm98, %vm99
      %v101 = vsel %vm100, %v91, %v88
      %v102 = vsel %vm100, %v93, -inf
      %v103 = vrot.slane %v102, 1
      %v104 = vrot.slane %v101, 1
      %vm105 = vcmp.ge.f32.partialorder %v103, %v102
      %v106 = vsel %vm105, %v103, %v102
      %v107 = vsel %vm105, %v104, %v101
      %v108 = vrot.slane %v103, 1
      %v109 = vrot.slane %v104, 1
      %vm110 = vcmp.ge.f32.partialorder %v108, %v106
      %v111 = vsel %vm110, %v108, %v106
      %v112 = vsel %vm110, %v109, %v107
      %v113 = vrot.slane %v108, 1
      %v114 = vrot.slane %v109, 1
      %vm115 = vcmp.ge.f32.partialorder %v113, %v111
      %v116 = vsel %vm115, %v113, %v111
      %v117 = vsel %vm115, %v114, %v112
      %v118 = vrot.slane %v113, 1
      %v119 = vrot.slane %v114, 1
      %vm120 = vcmp.ge.f32.partialorder %v118, %v116
      %v121 = vsel %vm120, %v118, %v116
      %v122 = vsel %vm120, %v119, %v117
      %v123 = vrot.slane %v118, 1
      %v124 = vrot.slane %v119, 1
      %vm125 = vcmp.ge.f32.partialorder %v123, %v121
      %v126 = vsel %vm125, %v123, %v121
      %v127 = vsel %vm125, %v124, %v122
      %v128 = vrot.slane %v123, 1
      %v129 = vrot.slane %v124, 1
      %vm130 = vcmp.ge.f32.partialorder %v128, %v126
      %v131 = vsel %vm130, %v128, %v126
      %v132 = vsel %vm130, %v129, %v127
      %v133 = vrot.slane %v128, 1
      %v134 = vrot.slane %v129, 1
      %vm135 = vcmp.ge.f32.partialorder %v133, %v131
      %v136 = vsel %vm135, %v133, %v131
      %v137 = vsel %vm135, %v134, %v132
      %s138 = ssub.s32 128, %s83
      %139 = vrot.lane.b32.xlu0 %v137, %s138
      %v140 = vpop.permute.xlu0 %139
      %s141 = vtos %v140
      %v142 = vstv %s83
      %v143 = vlaneseq
      %v144 = vand.u32 %v143, 127
      %vm145 = vcmp.eq.s32.totalorder %v144, %v142
      %v146 = vstv %s141
      %v147 = vld [vmem:[#allocation4] ss:$0 sm:$0xff]
      %v148 = vsel %vm145, %v146, %v147
      %149 = vst [vmem:[#allocation4] sm:$0x1] %v148
      %s150 = scalar_lea.vmem [#allocation2], %s83
      %s151 = scalar_lea.vmem [#allocation2], %s141
      %v152 = vld [vmem:[%s150] ss:$0 sm:$0xff]
      %v153 = vld [vmem:[%s151] ss:$0 sm:$0xff]
      %154 = vst [vmem:[%s151] sm:$0x1] %v152
      %155 = vst [vmem:[%s150] sm:$0x1] %v153
      %s156 = scalar_lea.vmem [#allocation9], %s83
      %s157 = scalar_lea.vmem [#allocation9], %s141
      %v158 = vld [vmem:[%s156] ss:$0 sm:$0xff]
      %v159 = vld [vmem:[%s157] ss:$0 sm:$0xff]
      %160 = vst [vmem:[%s157] sm:$0x1] %v158
      %161 = vst [vmem:[%s156] sm:$0x1] %v159
      %vm162 = vcmp.ne.f32.partialorder %v153, 0.0
      %vm163 = vmand %vm145, %vm162
      %v164 = vsel %vm163, %v153, 1.0
      %v165 = vlaneseq
      %v166 = vand.u32 %v165, 127
      %v167 = vstv %s83
      %vm168 = vcmp.gt.s32.totalorder %v166, %v167
      %v169 = vsel %vm168, %v153, 0.0
      %v170 = vlaneseq
      %v171 = vshrl.u32 %v170, 7
      %v172 = vmov %v171
      %v173 = vld [vmem:[#allocation2] sm:$0xff]
      %v175 = vstv %s83
      %vm176 = vcmp.gt.s32.totalorder %v172, %v175
      %v177 = vsel %vm176, %v164, 1.0
      %v178 = vrcp.pop %v177
      %v179 = vmul.f32 %v173, %v178
      %vm180 = vmand %vm176, %vm145
      %v181 = vsel %vm180, %v179, 0.0
      %182 = vadd.xlane.f32.xlu0 %v181
      %v183 = vpop.xlane.xlu0 %182
      %v184 = vmul.f32 %v183, %v169
      %v185 = vsub.f32 %v179, %v184
      %186 = vst [vmem:[#allocation2] sm:$0xff] %v185
    $region29: #{custom-call.11} parent=1 // loop_footer
      %s87 = sadd.s32 1, %s83
    $region30: #{custom-call.11} parent=1 // loop_footer_branch
      %82 = sbr.rel target = $region26
    $region31: #{custom-call.11} parent=1 // loop_exit
      _
    %v187 = vld [vmem:[#allocation9] sm:$0xff]
    %s188 = scalar_lea.vmem [#allocation9], 8
    %s189 = scalar_lea.vmem [#allocation9], 16
    %s190 = scalar_lea.vmem [#allocation9], 24
    %s191 = scalar_lea.vmem [#allocation9], 32
    %s192 = scalar_lea.vmem [#allocation9], 40
    %s193 = scalar_lea.vmem [#allocation9], 48
    %s194 = scalar_lea.vmem [#allocation9], 56
    %s195 = scalar_lea.vmem [#allocation9], 64
    %s196 = scalar_lea.vmem [#allocation9], 72
    %s197 = scalar_lea.vmem [#allocation9], 80
    %s198 = scalar_lea.vmem [#allocation9], 88
    %s199 = scalar_lea.vmem [#allocation9], 96
    %s200 = scalar_lea.vmem [#allocation9], 104
    %s201 = scalar_lea.vmem [#allocation9], 112
    %s202 = scalar_lea.vmem [#allocation9], 120
    %203 = vxpose.xlu0.b32.start [1/16] %v187, 128
    %204 = vxpose.xlu0.b32.cont [2/16] 0, 128
    %205 = vxpose.xlu0.b32.cont [3/16] 0, 128
    %206 = vxpose.xlu0.b32.cont [4/16] 0, 128
    %207 = vxpose.xlu0.b32.cont [5/16] 0, 128
    %208 = vxpose.xlu0.b32.cont [6/16] 0, 128
    %209 = vxpose.xlu0.b32.cont [7/16] 0, 128
    %210 = vxpose.xlu0.b32.cont [8/16] 0, 128
    %211 = vxpose.xlu0.b32.cont [9/16] 0, 128
    %212 = vxpose.xlu0.b32.cont [10/16] 0, 128
    %213 = vxpose.xlu0.b32.cont [11/16] 0, 128
    %214 = vxpose.xlu0.b32.cont [12/16] 0, 128
    %215 = vxpose.xlu0.b32.cont [13/16] 0, 128
    %216 = vxpose.xlu0.b32.cont [14/16] 0, 128
    %217 = vxpose.xlu0.b32.cont [15/16] 0, 128
    %218 = vxpose.xlu0.b32.end [16/16] 0, 128
    %v219 = vpop.trf.xlu0
    %v220 = vpop.trf.xlu0
    %v221 = vpop.trf.xlu0
    %v222 = vpop.trf.xlu0
    %v223 = vpop.trf.xlu0
    %v224 = vpop.trf.xlu0
    %v225 = vpop.trf.xlu0
    %v226 = vpop.trf.xlu0
    %v227 = vpop.trf.xlu0
    %v228 = vpop.trf.xlu0
    %v229 = vpop.trf.xlu0
    %v230 = vpop.trf.xlu0
    %v231 = vpop.trf.xlu0
    %v232 = vpop.trf.xlu0
    %v233 = vpop.trf.xlu0
    %v234 = vpop.trf.xlu0
    %235 = vst [vmem:[#allocation7] sm:$0x1] %v219
    %s237 = sshll.u32 1, 4
    %s238 = ssub.s32 %s237, 1
    %v240 = vld [vmem:[#allocation2] sm:%s238]
    %s241 = sshll.u32 1, 4
    %s242 = ssub.s32 %s241, 1
    %243 = vst [vmem:[#allocation3] sm:%s242] %v240
    %s245 = sshll.u32 1, 1
    %s246 = ssub.s32 %s245, 1
    %v248 = vld [vmem:[#allocation4] sm:%s246]
    %s249 = sshll.u32 1, 1
    %s250 = ssub.s32 %s249, 1
    %251 = vst [vmem:[#allocation5] sm:%s250] %v248
    %s253 = sshll.u32 1, 1
    %s254 = ssub.s32 %s253, 1
    %v256 = vld [vmem:[#allocation7] sm:%s254]
    %s257 = sshll.u32 1, 1
    %s258 = ssub.s32 %s257, 1
    %259 = vst [vmem:[#allocation8] sm:%s258] %v256
    %p261 = scmp.gt.s32.totalorder 4, 0
    // Predicated region
    $region32: #{custom-call.11} parent=1 // pred_check
      %p262 = pneg %p261
    $region33: #{custom-call.11} parent=1 // pred_check_branch
      %264 = sbr.rel (%p262) target = $region35
    $region34: #{custom-call.11} parent=1 // pred_region
      %s265 = sshra.s32 4, 3
      %p266 = scmp.gt.s32.totalorder %s265, 0
      // Predicated region
      $region36: #{custom-call.11} parent=34 // pred_check
        %p267 = pneg %p266
      $region37: #{custom-call.11} parent=34 // pred_check_branch
        %269 = sbr.rel (%p267) target = $region39
      $region38: #{custom-call.11} parent=34 // pred_region
        %s270 = ssub.s32 %s265, 1
        %s271 = smul.u32 %s270, 128
        %s272 = sshra.s32 %s271, 4
        %s273 = scalar_lea.vmem [#allocation3], %s272
        %v274 = vld [vmem:[#allocation3] sm:$0xff]
        // While loop
        $region40: #{custom-call.11} parent=38 // loop_pre_header
          _
        $region41: #{custom-call.11} parent=38 // loop_header
          %s275 = sphi [#allocation3], %s297
          %s276 = sphi %s1, %s298
          %v277 = vphi %v274, %v299
          %s278 = ssub.s32 %s273, 64
          %p279 = scmp.gt.s32.totalorder %s275, %s278
        $region42: #{custom-call.11} parent=38 // loop_header_branch
          %281 = sbr.rel (%p279) target = $region46
        $region43: #{custom-call.11} parent=38 // loop_body
          %282 = vst [vmem:[%s276] sm:$0xff] %v277
          %v283 = vld [vmem:[%s275 + $0x8] sm:$0xff]
          %284 = vst [vmem:[%s276 + $0x8] sm:$0xff] %v283
          %v285 = vld [vmem:[%s275 + $0x10] sm:$0xff]
          %286 = vst [vmem:[%s276 + $0x10] sm:$0xff] %v285
          %v287 = vld [vmem:[%s275 + $0x18] sm:$0xff]
          %288 = vst [vmem:[%s276 + $0x18] sm:$0xff] %v287
          %v289 = vld [vmem:[%s275 + $0x20] sm:$0xff]
          %290 = vst [vmem:[%s276 + $0x20] sm:$0xff] %v289
          %v291 = vld [vmem:[%s275 + $0x28] sm:$0xff]
          %292 = vst [vmem:[%s276 + $0x28] sm:$0xff] %v291
          %v293 = vld [vmem:[%s275 + $0x30] sm:$0xff]
          %294 = vst [vmem:[%s276 + $0x30] sm:$0xff] %v293
          %v295 = vld [vmem:[%s275 + $0x38] sm:$0xff]
          %296 = vst [vmem:[%s276 + $0x38] sm:$0xff] %v295
        $region44: #{custom-call.11} parent=38 // loop_footer
          %s297 = scalar_lea.vmem %s275, 64
          %s298 = scalar_lea.vmem %s276, 64
          %v299 = vld [vmem:[%s275 + $0x40] sm:$0xff]
        $region45: #{custom-call.11} parent=38 // loop_footer_branch
          %300 = sbr.rel target = $region41
        $region46: #{custom-call.11} parent=38 // loop_exit
          _
        // While loop
        $region47: #{custom-call.11} parent=38 // loop_pre_header
          _
        $region48: #{custom-call.11} parent=38 // loop_header
          %s301 = sphi %s275, %s309
          %s302 = sphi %s276, %s310
          %v303 = vphi %v277, %v303
          %p304 = scmp.gt.s32.totalorder %s301, %s273
        $region49: #{custom-call.11} parent=38 // loop_header_branch
          %306 = sbr.rel (%p304) target = $region53
        $region50: #{custom-call.11} parent=38 // loop_body
          %v307 = vld [vmem:[%s301] sm:$0xff]
          %308 = vst [vmem:[%s302] sm:$0xff] %v307
        $region51: #{custom-call.11} parent=38 // loop_footer
          %s309 = scalar_lea.vmem %s301, 8
          %s310 = scalar_lea.vmem %s302, 8
        $region52: #{custom-call.11} parent=38 // loop_footer_branch
          %311 = sbr.rel target = $region48
        $region53: #{custom-call.11} parent=38 // loop_exit
          _
      $region39: #{custom-call.11} parent=34 // pred_fallthru
        _
      %s312 = sand.u32 4, 7
      %s313 = sshll.u32 1, %s312
      %s314 = ssub.s32 %s313, 1
      %s315 = smul.u32 %s265, 128
      %s316 = sshra.s32 %s315, 4
      %s317 = scalar_lea.vmem %s1, %s316
      %s318 = smul.u32 %s265, 128
      %s319 = sshra.s32 %s318, 4
      %s320 = scalar_lea.vmem [#allocation3], %s319
      %v321 = vld [vmem:[%s320] sm:%s314]
      %322 = vst [vmem:[%s317] sm:%s314] %v321
    $region35: #{custom-call.11} parent=1 // pred_fallthru
      _
    // Predicated region
    $region54: #{custom-call.11} parent=1 // pred_check
      _
    $region55: #{custom-call.11} parent=1 // pred_check_branch
      %324 = sbr.rel (0) target = $region57
    $region56: #{custom-call.11} parent=1 // pred_region
      %s326 = ssub.s32 16, 16
      %327 = vsyncadd [#allocation6], %s326
      %s328 = sshll.u32 [#allocation5], 4
      %s329 = int_to_ptr.vmem [resolvable:$true] %s328
      %331 = dma.vmem_to_hbm [thread:$0]  %s329, 16, %s2, [#allocation6]
    $region57: #{custom-call.11} parent=1 // pred_fallthru
      _
    // Predicated region
    $region58: #{custom-call.11} parent=1 // pred_check
      _
    $region59: #{custom-call.11} parent=1 // pred_check_branch
      %333 = sbr.rel (0) target = $region61
    $region60: #{custom-call.11} parent=1 // pred_region
      %p335 = scmp.gt.s32.totalorder 1, 0
      // Predicated region
      $region62: #{custom-call.11} parent=60 // pred_check
        %p336 = pneg %p335
      $region63: #{custom-call.11} parent=60 // pred_check_branch
        %338 = sbr.rel (%p336) target = $region65
      $region64: #{custom-call.11} parent=60 // pred_region
        %s339 = sshra.s32 1, 3
        %p340 = scmp.gt.s32.totalorder %s339, 0
        // Predicated region
        $region66: #{custom-call.11} parent=64 // pred_check
          %p341 = pneg %p340
        $region67: #{custom-call.11} parent=64 // pred_check_branch
          %343 = sbr.rel (%p341) target = $region69
        $region68: #{custom-call.11} parent=64 // pred_region
          %s344 = ssub.s32 %s339, 1
          %s345 = smul.u32 %s344, 128
          %s346 = sshra.s32 %s345, 4
          %s347 = scalar_lea.vmem [#allocation8], %s346
          %v348 = vld [vmem:[#allocation8] sm:$0xff]
          // While loop
          $region70: #{custom-call.11} parent=68 // loop_pre_header
            _
          $region71: #{custom-call.11} parent=68 // loop_header
            %s349 = sphi [#allocation8], %s371
            %s350 = sphi %s3, %s372
            %v351 = vphi %v348, %v373
            %s352 = ssub.s32 %s347, 64
            %p353 = scmp.gt.s32.totalorder %s349, %s352
          $region72: #{custom-call.11} parent=68 // loop_header_branch
            %355 = sbr.rel (%p353) target = $region76
          $region73: #{custom-call.11} parent=68 // loop_body
            %356 = vst [vmem:[%s350] sm:$0xff] %v351
            %v357 = vld [vmem:[%s349 + $0x8] sm:$0xff]
            %358 = vst [vmem:[%s350 + $0x8] sm:$0xff] %v357
            %v359 = vld [vmem:[%s349 + $0x10] sm:$0xff]
            %360 = vst [vmem:[%s350 + $0x10] sm:$0xff] %v359
            %v361 = vld [vmem:[%s349 + $0x18] sm:$0xff]
            %362 = vst [vmem:[%s350 + $0x18] sm:$0xff] %v361
            %v363 = vld [vmem:[%s349 + $0x20] sm:$0xff]
            %364 = vst [vmem:[%s350 + $0x20] sm:$0xff] %v363
            %v365 = vld [vmem:[%s349 + $0x28] sm:$0xff]
            %366 = vst [vmem:[%s350 + $0x28] sm:$0xff] %v365
            %v367 = vld [vmem:[%s349 + $0x30] sm:$0xff]
            %368 = vst [vmem:[%s350 + $0x30] sm:$0xff] %v367
            %v369 = vld [vmem:[%s349 + $0x38] sm:$0xff]
            %370 = vst [vmem:[%s350 + $0x38] sm:$0xff] %v369
          $region74: #{custom-call.11} parent=68 // loop_footer
            %s371 = scalar_lea.vmem %s349, 64
            %s372 = scalar_lea.vmem %s350, 64
            %v373 = vld [vmem:[%s349 + $0x40] sm:$0xff]
          $region75: #{custom-call.11} parent=68 // loop_footer_branch
            %374 = sbr.rel target = $region71
          $region76: #{custom-call.11} parent=68 // loop_exit
            _
          // While loop
          $region77: #{custom-call.11} parent=68 // loop_pre_header
            _
          $region78: #{custom-call.11} parent=68 // loop_header
            %s375 = sphi %s349, %s383
            %s376 = sphi %s350, %s384
            %v377 = vphi %v351, %v377
            %p378 = scmp.gt.s32.totalorder %s375, %s347
          $region79: #{custom-call.11} parent=68 // loop_header_branch
            %380 = sbr.rel (%p378) target = $region83
          $region80: #{custom-call.11} parent=68 // loop_body
            %v381 = vld [vmem:[%s375] sm:$0xff]
            %382 = vst [vmem:[%s376] sm:$0xff] %v381
          $region81: #{custom-call.11} parent=68 // loop_footer
            %s383 = scalar_lea.vmem %s375, 8
            %s384 = scalar_lea.vmem %s376, 8
          $region82: #{custom-call.11} parent=68 // loop_footer_branch
            %385 = sbr.rel target = $region78
          $region83: #{custom-call.11} parent=68 // loop_exit
            _
        $region69: #{custom-call.11} parent=64 // pred_fallthru
          _
        %s386 = sand.u32 1, 7
        %s387 = sshll.u32 1, %s386
        %s388 = ssub.s32 %s387, 1
        %s389 = smul.u32 %s339, 128
        %s390 = sshra.s32 %s389, 4
        %s391 = scalar_lea.vmem %s3, %s390
        %s392 = smul.u32 %s339, 128
        %s393 = sshra.s32 %s392, 4
        %s394 = scalar_lea.vmem [#allocation8], %s393
        %v395 = vld [vmem:[%s394] sm:%s388]
        %396 = vst [vmem:[%s391] sm:%s388] %v395
      $region65: #{custom-call.11} parent=60 // pred_fallthru
        _
    $region61: #{custom-call.11} parent=1 // pred_fallthru
      _
    // Predicated region
    $region84: #{custom-call.11} parent=1 // pred_check
      _
    $region85: #{custom-call.11} parent=1 // pred_check_branch
      %398 = sbr.rel (0) target = $region87
    $region86: #{custom-call.11} parent=1 // pred_region
      %399 = dma.done [#allocation6], 16
    $region87: #{custom-call.11} parent=1 // pred_fallthru
      _
    // Predicated region
    $region88: #{custom-call.11} parent=1 // pred_check
      _
    $region89: #{custom-call.11} parent=1 // pred_check_branch
      %401 = sbr.rel (0) target = $region91
    $region90: #{custom-call.11} parent=1 // pred_region
      _
    $region91: #{custom-call.11} parent=1 // pred_fallthru
      _
    %402 = vsyncpa [#allocation6], 1

// kernel: custom-call.12
$region0: #{custom-call.12}
  %s0 = inlined_call_operand.vmem [shape: f32[1,4,4], index: 0, kind: input, shape index: {}]
  %s1 = inlined_call_operand.vmem [shape: f32[1,4,4], index: 1, kind: output, shape index: {}]
  $region1: #{custom-call.12} parent=0
    #allocation0 [shape = 'u8[4096]{0}', space=vmem, size = 0x1000, scoped, tag = 'operand span for operand 0']
    #allocation1 [shape = 'u8[2048]{0}', space=vmem, size = 0x800, scoped, tag = 'packed  for operand 0']
    #allocation2 [shape = 'u8[4096]{0}', space=vmem, size = 0x1000, scoped, tag = 'operand span for operand 1']
    #allocation3 [shape = 'u8[2048]{0}', space=vmem, size = 0x800, scoped, tag = 'packed  for operand 1']
    #allocation4 [shape = 'f32[4,4]{1,0}', space=vmem, size = 0x1000, scoped, tag = 'rescaled input a']
    // Predicated region
    $region2: #{custom-call.12} parent=1 // pred_check
      _
    $region3: #{custom-call.12} parent=1 // pred_check_branch
      %3 = sbr.rel (0) target = $region5
    $region4: #{custom-call.12} parent=1 // pred_region
      // Predicated region
      $region6: #{custom-call.12} parent=4 // pred_check
        _
      $region7: #{custom-call.12} parent=4 // pred_check_branch
        %5 = sbr.rel target = $region9
      $region8: #{custom-call.12} parent=4 // pred_region
        // Predicated region
        $region21: #{custom-call.12} parent=8 // pred_check
          _
        $region22: #{custom-call.12} parent=8 // pred_check_branch
          %21 = sbr.rel (0) target = $region24
        $region23: #{custom-call.12} parent=8 // pred_region
          %s23 = ssub.s32 16, 1
          loop: start=0, step=1, limit=1
          $region25: #{custom-call.12} parent=23 // loop_pre_header
            _
          $region26: #{custom-call.12} parent=23 // loop_header
            %s25 = sphi 0, %s29
            %p26 = scmp.ge.s32.totalorder %s25, 1
            %s30 = sphi %s0, %s0
            %s31 = sphi [#allocation1], [#allocation1]
          $region27: #{custom-call.12} parent=23 // loop_header_branch
            %28 = sbr.rel (%p26) target = $region31
          $region28: #{custom-call.12} parent=23 // loop_body
            %v32 = vld [vmem:[%s30] sm:%s23]
            %33 = vst [vmem:[%s31] sm:%s23] %v32
          $region29: #{custom-call.12} parent=23 // loop_footer
            %s29 = sadd.s32 1, %s25
          $region30: #{custom-call.12} parent=23 // loop_footer_branch
            %24 = sbr.rel target = $region26
          $region31: #{custom-call.12} parent=23 // loop_exit
            _
        $region24: #{custom-call.12} parent=8 // pred_fallthru
          _
      $region9: #{custom-call.12} parent=4 // pred_fallthru
        _
      // Predicated region
      $region10: #{custom-call.12} parent=4 // pred_check
        _
      $region11: #{custom-call.12} parent=4 // pred_check_branch
        %7 = sbr.rel (0) target = $region13
      $region12: #{custom-call.12} parent=4 // pred_region
        %s9 = ssub.s32 16, 1
        loop: start=0, step=1, limit=1
        $region14: #{custom-call.12} parent=12 // loop_pre_header
          _
        $region15: #{custom-call.12} parent=12 // loop_header
          %s11 = sphi 0, %s15
          %p12 = scmp.ge.s32.totalorder %s11, 1
          %s16 = sphi %s0, %s0
          %s17 = sphi [#allocation1], [#allocation1]
        $region16: #{custom-call.12} parent=12 // loop_header_branch
          %14 = sbr.rel (%p12) target = $region20
        $region17: #{custom-call.12} parent=12 // loop_body
          %v18 = vld [vmem:[%s16] sm:%s9]
          %19 = vst [vmem:[%s17] sm:%s9] %v18
        $region18: #{custom-call.12} parent=12 // loop_footer
          %s15 = sadd.s32 1, %s11
        $region19: #{custom-call.12} parent=12 // loop_footer_branch
          %10 = sbr.rel target = $region15
        $region20: #{custom-call.12} parent=12 // loop_exit
          _
      $region13: #{custom-call.12} parent=4 // pred_fallthru
        _
    $region5: #{custom-call.12} parent=1 // pred_fallthru
      _
    %34 = vnop
    %s36 = sshll.u32 1, 4
    %s37 = ssub.s32 %s36, 1
    %v38 = vld [vmem:[#allocation1] sm:%s37]
    %39 = vst [vmem:[#allocation0] sm:%s37] %v38
    %v40 = vlaneseq
    %v41 = vand.u32 %v40, 127
    %vm42 = vcmp.lt.s32.totalorder %v41, 4
    %v43 = vlaneseq
    %v44 = vshrl.u32 %v43, 7
    %vm46 = vcmp.eq.s32.totalorder %v44, %v41
    %v47 = vld [vmem:[#allocation0] sm:$0xff]
    %v48 = vsel %vm46, %v47, 0.0
    %49 = vadd.xlane.f32.xlu0 %v48
    %v50 = vpop.xlane.xlu0 %49
    %vm51 = vcmp.le.s32.totalorder %v44, %v41
    %vm52 = vmand %vm51, %vm42
    %v53 = vsel %vm52, %v47, 0.0
    %v54 = vrcp.pop %v50
    %v55 = vmul.f32 %v53, %v54
    %56 = vst [vmem:[#allocation4] sm:$0xff] %v55
    %v57 = vlaneseq
    %v58 = vand.u32 %v57, 127
    %v59 = vlaneseq
    %v60 = vshrl.u32 %v59, 7
    %vm62 = vcmp.eq.s32.totalorder %v58, %v60
    %v63 = vlaneseq
    %v64 = vand.u32 %v63, 127
    %vm65 = vcmp.eq.s32.totalorder %v64, 3
    %v66 = vsel %vm65, 1.0, -1.0
    %v67 = vsel %vm62, %v66, 0.0
    %s68 = scalar_lea.vmem [#allocation4], 2
    %v69 = vld [vmem:[%s68] ss:$0 sm:$0xff]
    %v70 = vxor.u32 %v69, 2147483648
    %v71 = vlaneseq
    %v72 = vand.u32 %v71, 127
    %vm73 = vcmp.eq.s32.totalorder %v72, 2
    %v74 = vmul.f32 %v70, %v67
    %75 = vadd.xlane.f32.xlu0 %v74
    %v76 = vpop.xlane.xlu0 %75
    %v77 = vsel %vm73, %v76, %v67
    %s78 = scalar_lea.vmem [#allocation4], 1
    %v79 = vld [vmem:[%s78] ss:$0 sm:$0xff]
    %v80 = vxor.u32 %v79, 2147483648
    %v81 = vlaneseq
    %v82 = vand.u32 %v81, 127
    %vm83 = vcmp.eq.s32.totalorder %v82, 1
    %v84 = vmul.f32 %v80, %v77
    %85 = vadd.xlane.f32.xlu0 %v84
    %v86 = vpop.xlane.xlu0 %85
    %v87 = vsel %vm83, %v86, %v77
    %v88 = vld [vmem:[#allocation4] ss:$0 sm:$0xff]
    %v89 = vxor.u32 %v88, 2147483648
    %v90 = vlaneseq
    %v91 = vand.u32 %v90, 127
    %vm92 = vcmp.eq.s32.totalorder %v91, 0
    %v93 = vmul.f32 %v89, %v87
    %94 = vadd.xlane.f32.xlu0 %v93
    %v95 = vpop.xlane.xlu0 %94
    %v96 = vsel %vm92, %v95, %v87
    %v97 = vrcp.pop %v50
    %v98 = vmul.f32 %v96, %v97
    %vm99 = vweird.f32 %v50
    %v100 = vsel %vm99, %v96, %v98
    %101 = vst [vmem:[#allocation2] sm:$0xff] %v100
    %s103 = sshll.u32 1, 4
    %s104 = ssub.s32 %s103, 1
    %v106 = vld [vmem:[#allocation2] sm:%s104]
    %s107 = sshll.u32 1, 4
    %s108 = ssub.s32 %s107, 1
    %109 = vst [vmem:[#allocation3] sm:%s108] %v106
    // Predicated region
    $region32: #{custom-call.12} parent=1 // pred_check
      _
    $region33: #{custom-call.12} parent=1 // pred_check_branch
      %111 = sbr.rel (0) target = $region35
    $region34: #{custom-call.12} parent=1 // pred_region
      // Predicated region
      $region36: #{custom-call.12} parent=34 // pred_check
        _
      $region37: #{custom-call.12} parent=34 // pred_check_branch
        %113 = sbr.rel target = $region39
      $region38: #{custom-call.12} parent=34 // pred_region
        // Predicated region
        $region51: #{custom-call.12} parent=38 // pred_check
          _
        $region52: #{custom-call.12} parent=38 // pred_check_branch
          %129 = sbr.rel (0) target = $region54
        $region53: #{custom-call.12} parent=38 // pred_region
          %s131 = ssub.s32 16, 1
          loop: start=0, step=1, limit=1
          $region55: #{custom-call.12} parent=53 // loop_pre_header
            _
          $region56: #{custom-call.12} parent=53 // loop_header
            %s133 = sphi 0, %s137
            %p134 = scmp.ge.s32.totalorder %s133, 1
            %s138 = sphi [#allocation3], [#allocation3]
            %s139 = sphi %s1, %s1
          $region57: #{custom-call.12} parent=53 // loop_header_branch
            %136 = sbr.rel (%p134) target = $region61
          $region58: #{custom-call.12} parent=53 // loop_body
            %v140 = vld [vmem:[%s138] sm:%s131]
            %141 = vst [vmem:[%s139] sm:%s131] %v140
          $region59: #{custom-call.12} parent=53 // loop_footer
            %s137 = sadd.s32 1, %s133
          $region60: #{custom-call.12} parent=53 // loop_footer_branch
            %132 = sbr.rel target = $region56
          $region61: #{custom-call.12} parent=53 // loop_exit
            _
        $region54: #{custom-call.12} parent=38 // pred_fallthru
          _
      $region39: #{custom-call.12} parent=34 // pred_fallthru
        _
      // Predicated region
      $region40: #{custom-call.12} parent=34 // pred_check
        _
      $region41: #{custom-call.12} parent=34 // pred_check_branch
        %115 = sbr.rel (0) target = $region43
      $region42: #{custom-call.12} parent=34 // pred_region
        %s117 = ssub.s32 16, 1
        loop: start=0, step=1, limit=1
        $region44: #{custom-call.12} parent=42 // loop_pre_header
          _
        $region45: #{custom-call.12} parent=42 // loop_header
          %s119 = sphi 0, %s123
          %p120 = scmp.ge.s32.totalorder %s119, 1
          %s124 = sphi [#allocation3], [#allocation3]
          %s125 = sphi %s1, %s1
        $region46: #{custom-call.12} parent=42 // loop_header_branch
          %122 = sbr.rel (%p120) target = $region50
        $region47: #{custom-call.12} parent=42 // loop_body
          %v126 = vld [vmem:[%s124] sm:%s117]
          %127 = vst [vmem:[%s125] sm:%s117] %v126
        $region48: #{custom-call.12} parent=42 // loop_footer
          %s123 = sadd.s32 1, %s119
        $region49: #{custom-call.12} parent=42 // loop_footer_branch
          %118 = sbr.rel target = $region45
        $region50: #{custom-call.12} parent=42 // loop_exit
          _
      $region43: #{custom-call.12} parent=34 // pred_fallthru
        _
    $region35: #{custom-call.12} parent=1 // pred_fallthru
      _
    %142 = vnop

// kernel: custom-call.13
$region0: #{custom-call.13}
  %s0 = inlined_call_operand.vmem [shape: f32[1,4,4], index: 0, kind: input, shape index: {}]
  %s1 = inlined_call_operand.vmem [shape: f32[1,4,4], index: 1, kind: output, shape index: {}]
  $region1: #{custom-call.13} parent=0
    #allocation0 [shape = 'u8[4096]{0}', space=vmem, size = 0x1000, scoped, tag = 'operand span for operand 0']
    #allocation1 [shape = 'u8[2048]{0}', space=vmem, size = 0x800, scoped, tag = 'packed  for operand 0']
    #allocation2 [shape = 'u8[4096]{0}', space=vmem, size = 0x1000, scoped, tag = 'operand span for operand 1']
    #allocation3 [shape = 'u8[2048]{0}', space=vmem, size = 0x800, scoped, tag = 'packed  for operand 1']
    #allocation4 [shape = 'f32[4,4]{1,0}', space=vmem, size = 0x1000, scoped, tag = 'rescaled input a']
    // Predicated region
    $region2: #{custom-call.13} parent=1 // pred_check
      _
    $region3: #{custom-call.13} parent=1 // pred_check_branch
      %3 = sbr.rel (0) target = $region5
    $region4: #{custom-call.13} parent=1 // pred_region
      // Predicated region
      $region6: #{custom-call.13} parent=4 // pred_check
        _
      $region7: #{custom-call.13} parent=4 // pred_check_branch
        %5 = sbr.rel target = $region9
      $region8: #{custom-call.13} parent=4 // pred_region
        // Predicated region
        $region21: #{custom-call.13} parent=8 // pred_check
          _
        $region22: #{custom-call.13} parent=8 // pred_check_branch
          %21 = sbr.rel (0) target = $region24
        $region23: #{custom-call.13} parent=8 // pred_region
          %s23 = ssub.s32 16, 1
          loop: start=0, step=1, limit=1
          $region25: #{custom-call.13} parent=23 // loop_pre_header
            _
          $region26: #{custom-call.13} parent=23 // loop_header
            %s25 = sphi 0, %s29
            %p26 = scmp.ge.s32.totalorder %s25, 1
            %s30 = sphi %s0, %s0
            %s31 = sphi [#allocation1], [#allocation1]
          $region27: #{custom-call.13} parent=23 // loop_header_branch
            %28 = sbr.rel (%p26) target = $region31
          $region28: #{custom-call.13} parent=23 // loop_body
            %v32 = vld [vmem:[%s30] sm:%s23]
            %33 = vst [vmem:[%s31] sm:%s23] %v32
          $region29: #{custom-call.13} parent=23 // loop_footer
            %s29 = sadd.s32 1, %s25
          $region30: #{custom-call.13} parent=23 // loop_footer_branch
            %24 = sbr.rel target = $region26
          $region31: #{custom-call.13} parent=23 // loop_exit
            _
        $region24: #{custom-call.13} parent=8 // pred_fallthru
          _
      $region9: #{custom-call.13} parent=4 // pred_fallthru
        _
      // Predicated region
      $region10: #{custom-call.13} parent=4 // pred_check
        _
      $region11: #{custom-call.13} parent=4 // pred_check_branch
        %7 = sbr.rel (0) target = $region13
      $region12: #{custom-call.13} parent=4 // pred_region
        %s9 = ssub.s32 16, 1
        loop: start=0, step=1, limit=1
        $region14: #{custom-call.13} parent=12 // loop_pre_header
          _
        $region15: #{custom-call.13} parent=12 // loop_header
          %s11 = sphi 0, %s15
          %p12 = scmp.ge.s32.totalorder %s11, 1
          %s16 = sphi %s0, %s0
          %s17 = sphi [#allocation1], [#allocation1]
        $region16: #{custom-call.13} parent=12 // loop_header_branch
          %14 = sbr.rel (%p12) target = $region20
        $region17: #{custom-call.13} parent=12 // loop_body
          %v18 = vld [vmem:[%s16] sm:%s9]
          %19 = vst [vmem:[%s17] sm:%s9] %v18
        $region18: #{custom-call.13} parent=12 // loop_footer
          %s15 = sadd.s32 1, %s11
        $region19: #{custom-call.13} parent=12 // loop_footer_branch
          %10 = sbr.rel target = $region15
        $region20: #{custom-call.13} parent=12 // loop_exit
          _
      $region13: #{custom-call.13} parent=4 // pred_fallthru
        _
    $region5: #{custom-call.13} parent=1 // pred_fallthru
      _
    %34 = vnop
    %s36 = sshll.u32 1, 4
    %s37 = ssub.s32 %s36, 1
    %v38 = vld [vmem:[#allocation1] sm:%s37]
    %39 = vst [vmem:[#allocation0] sm:%s37] %v38
    %v40 = vlaneseq
    %v41 = vand.u32 %v40, 127
    %vm42 = vcmp.lt.s32.totalorder %v41, 4
    %v43 = vlaneseq
    %v44 = vshrl.u32 %v43, 7
    %vm46 = vcmp.eq.s32.totalorder %v44, %v41
    %v47 = vld [vmem:[#allocation0] sm:$0xff]
    %v48 = vsel %vm46, %v47, 0.0
    %49 = vadd.xlane.f32.xlu0 %v48
    %v50 = vpop.xlane.xlu0 %49
    %vm51 = vcmp.ge.s32.totalorder %v44, %v41
    %vm52 = vmand %vm51, %vm42
    %v53 = vsel %vm52, %v47, 0.0
    %v54 = vrcp.pop %v50
    %v55 = vmul.f32 %v53, %v54
    %56 = vst [vmem:[#allocation4] sm:$0xff] %v55
    %v57 = vlaneseq
    %v58 = vand.u32 %v57, 127
    %v59 = vlaneseq
    %v60 = vshrl.u32 %v59, 7
    %vm62 = vcmp.eq.s32.totalorder %v58, %v60
    %v63 = vlaneseq
    %v64 = vand.u32 %v63, 127
    %vm65 = vcmp.eq.s32.totalorder %v64, 0
    %v66 = vsel %vm65, 1.0, -1.0
    %v67 = vsel %vm62, %v66, 0.0
    %s68 = scalar_lea.vmem [#allocation4], 1
    %v69 = vld [vmem:[%s68] ss:$0 sm:$0xff]
    %v70 = vxor.u32 %v69, 2147483648
    %v71 = vlaneseq
    %v72 = vand.u32 %v71, 127
    %vm73 = vcmp.eq.s32.totalorder %v72, 1
    %v74 = vmul.f32 %v70, %v67
    %75 = vadd.xlane.f32.xlu0 %v74
    %v76 = vpop.xlane.xlu0 %75
    %v77 = vsel %vm73, %v76, %v67
    %s78 = scalar_lea.vmem [#allocation4], 2
    %v79 = vld [vmem:[%s78] ss:$0 sm:$0xff]
    %v80 = vxor.u32 %v79, 2147483648
    %v81 = vlaneseq
    %v82 = vand.u32 %v81, 127
    %vm83 = vcmp.eq.s32.totalorder %v82, 2
    %v84 = vmul.f32 %v80, %v77
    %85 = vadd.xlane.f32.xlu0 %v84
    %v86 = vpop.xlane.xlu0 %85
    %v87 = vsel %vm83, %v86, %v77
    %s88 = scalar_lea.vmem [#allocation4], 3
    %v89 = vld [vmem:[%s88] ss:$0 sm:$0xff]
    %v90 = vxor.u32 %v89, 2147483648
    %v91 = vlaneseq
    %v92 = vand.u32 %v91, 127
    %vm93 = vcmp.eq.s32.totalorder %v92, 3
    %v94 = vmul.f32 %v90, %v87
    %95 = vadd.xlane.f32.xlu0 %v94
    %v96 = vpop.xlane.xlu0 %95
    %v97 = vsel %vm93, %v96, %v87
    %v98 = vrcp.pop %v50
    %v99 = vmul.f32 %v97, %v98
    %vm100 = vweird.f32 %v50
    %v101 = vsel %vm100, %v97, %v99
    %102 = vst [vmem:[#allocation2] sm:$0xff] %v101
    %s104 = sshll.u32 1, 4
    %s105 = ssub.s32 %s104, 1
    %v107 = vld [vmem:[#allocation2] sm:%s105]
    %s108 = sshll.u32 1, 4
    %s109 = ssub.s32 %s108, 1
    %110 = vst [vmem:[#allocation3] sm:%s109] %v107
    // Predicated region
    $region32: #{custom-call.13} parent=1 // pred_check
      _
    $region33: #{custom-call.13} parent=1 // pred_check_branch
      %112 = sbr.rel (0) target = $region35
    $region34: #{custom-call.13} parent=1 // pred_region
      // Predicated region
      $region36: #{custom-call.13} parent=34 // pred_check
        _
      $region37: #{custom-call.13} parent=34 // pred_check_branch
        %114 = sbr.rel target = $region39
      $region38: #{custom-call.13} parent=34 // pred_region
        // Predicated region
        $region51: #{custom-call.13} parent=38 // pred_check
          _
        $region52: #{custom-call.13} parent=38 // pred_check_branch
          %130 = sbr.rel (0) target = $region54
        $region53: #{custom-call.13} parent=38 // pred_region
          %s132 = ssub.s32 16, 1
          loop: start=0, step=1, limit=1
          $region55: #{custom-call.13} parent=53 // loop_pre_header
            _
          $region56: #{custom-call.13} parent=53 // loop_header
            %s134 = sphi 0, %s138
            %p135 = scmp.ge.s32.totalorder %s134, 1
            %s139 = sphi [#allocation3], [#allocation3]
            %s140 = sphi %s1, %s1
          $region57: #{custom-call.13} parent=53 // loop_header_branch
            %137 = sbr.rel (%p135) target = $region61
          $region58: #{custom-call.13} parent=53 // loop_body
            %v141 = vld [vmem:[%s139] sm:%s132]
            %142 = vst [vmem:[%s140] sm:%s132] %v141
          $region59: #{custom-call.13} parent=53 // loop_footer
            %s138 = sadd.s32 1, %s134
          $region60: #{custom-call.13} parent=53 // loop_footer_branch
            %133 = sbr.rel target = $region56
          $region61: #{custom-call.13} parent=53 // loop_exit
            _
        $region54: #{custom-call.13} parent=38 // pred_fallthru
          _
      $region39: #{custom-call.13} parent=34 // pred_fallthru
        _
      // Predicated region
      $region40: #{custom-call.13} parent=34 // pred_check
        _
      $region41: #{custom-call.13} parent=34 // pred_check_branch
        %116 = sbr.rel (0) target = $region43
      $region42: #{custom-call.13} parent=34 // pred_region
        %s118 = ssub.s32 16, 1
        loop: start=0, step=1, limit=1
        $region44: #{custom-call.13} parent=42 // loop_pre_header
          _
        $region45: #{custom-call.13} parent=42 // loop_header
          %s120 = sphi 0, %s124
          %p121 = scmp.ge.s32.totalorder %s120, 1
          %s125 = sphi [#allocation3], [#allocation3]
          %s126 = sphi %s1, %s1
        $region46: #{custom-call.13} parent=42 // loop_header_branch
          %123 = sbr.rel (%p121) target = $region50
        $region47: #{custom-call.13} parent=42 // loop_body
          %v127 = vld [vmem:[%s125] sm:%s118]
          %128 = vst [vmem:[%s126] sm:%s118] %v127
        $region48: #{custom-call.13} parent=42 // loop_footer
          %s124 = sadd.s32 1, %s120
        $region49: #{custom-call.13} parent=42 // loop_footer_branch
          %119 = sbr.rel target = $region45
        $region50: #{custom-call.13} parent=42 // loop_exit
          _
      $region43: #{custom-call.13} parent=34 // pred_fallthru
        _
    $region35: #{custom-call.13} parent=1 // pred_fallthru
      _
    %143 = vnop

</llo_original>
